<compile_context>
chip_gen: v7x
topology: tpu7x:2x2x1
jax: 0.10.0
libtpu: 0.0.40
codegen_flags: <defaults>
</compile_context>

<pallas_src>
import jax
import jax.numpy as jnp
from jax.experimental import pallas as pl
from jax.experimental.pallas import tpu as pltpu

# MLP dims from the PyTorch module: 93 -> 50 -> 25 -> 12 -> 9
D_IN, D1, D2, D3, D_OUT = 93, 50, 25, 12, 9
D_OUT_PAD = 128  # lane-dense output slab width


def _round_up(v, m):
    return ((v + m - 1) // m) * m


def mlp_kernel(x_ref,
               w1_ref, b1_ref,
               w2_ref, b2_ref,
               w3_ref, b3_ref,
               w4_ref, b4_ref,
               o_ref):
    # x / weights arrive as bf16; every matmul accumulates in f32 and the
    # bias-add / ReLU stay in f32.
    x = x_ref[...]

    h1 = jnp.dot(x, w1_ref[...], preferred_element_type=jnp.float32) + b1_ref[...]
    h1 = jnp.maximum(h1, 0.0)

    h2 = jnp.dot(h1.astype(jnp.bfloat16), w2_ref[...],
                 preferred_element_type=jnp.float32) + b2_ref[...]
    h2 = jnp.maximum(h2, 0.0)

    h3 = jnp.dot(h2.astype(jnp.bfloat16), w3_ref[...],
                 preferred_element_type=jnp.float32) + b3_ref[...]
    h3 = jnp.maximum(h3, 0.0)

    # w4/b4 are zero-padded to 128 output lanes -> full-width unmasked store.
    o_ref[...] = (jnp.dot(h3.astype(jnp.bfloat16), w4_ref[...],
                          preferred_element_type=jnp.float32)
                  + b4_ref[...]).astype(o_ref.dtype)


def net_forward(x, params, *, tb=None):
    """Pallas implementation of Net.forward. x: (B, 93) f32 -> (B, 9) f32.

    tb: rows per grid step. Default: whole batch (single grid step) for small
    batches, capped at 1024 rows for large batches. Pass tb explicitly
    (multiple of 16, ideally 512-2048) to tune for a given chip/batch.
    """
    (w1, b1), (w2, b2), (w3, b3), (w4, b4) = params
    B = x.shape[0]

    if tb is None:
        tb = min(_round_up(max(B, 1), 16), 1024)
    tb = _round_up(tb, 16)  # keep bf16 sublane tiling happy
    B_pad = _round_up(B, tb)

    if B_pad != B:
        x = jnp.pad(x, ((0, B_pad - B), (0, 0)))
    x_bf = x.astype(jnp.bfloat16)

    # bf16 weights (halves HBM bytes); biases stay f32.
    w1_bf = w1.astype(jnp.bfloat16)
    w2_bf = w2.astype(jnp.bfloat16)
    w3_bf = w3.astype(jnp.bfloat16)
    # Pad the last layer's output dim to 128 lanes (extra columns are exact 0).
    w4_pad = jnp.zeros((D3, D_OUT_PAD), jnp.bfloat16).at[:, :D_OUT].set(
        w4.astype(jnp.bfloat16))
    b4_pad = jnp.zeros((1, D_OUT_PAD), jnp.float32).at[:, :D_OUT].set(
        b4.astype(jnp.float32))

    def full_spec(shape):
        nd = len(shape)
        return pl.BlockSpec(shape, lambda i: (0,) * nd)

    out_pad = pl.pallas_call(
        mlp_kernel,
        out_shape=jax.ShapeDtypeStruct((B_pad, D_OUT_PAD), jnp.float32),
        grid_spec=pltpu.PrefetchScalarGridSpec(
            num_scalar_prefetch=0,
            grid=(B_pad // tb,),
            in_specs=[
                pl.BlockSpec((tb, D_IN), lambda i: (i, 0)),  # x tile over batch
                full_spec((D_IN, D1)), full_spec((1, D1)),
                full_spec((D1, D2)), full_spec((1, D2)),
                full_spec((D2, D3)), full_spec((1, D3)),
                full_spec((D3, D_OUT_PAD)), full_spec((1, D_OUT_PAD)),
            ],
            out_specs=pl.BlockSpec((tb, D_OUT_PAD), lambda i: (i, 0)),
        ),
        compiler_params=pltpu.CompilerParams(
            dimension_semantics=("parallel",)),
    )(x_bf, w1_bf, b1, w2_bf, b2, w3_bf, b3, w4_pad, b4_pad)

    # Strip batch padding and the lane padding of the output slab.
    return out_pad[:B, :D_OUT]


def init_params(key):
    """Deterministic init matching the nn.Linear shapes (stored as (in, out))."""
    dims = [(D_IN, D1), (D1, D2), (D2, D3), (D3, D_OUT)]
    params = []
    for (fan_in, fan_out) in dims:
        key, kw, kb = jax.random.split(key, 3)
        bound = 1.0 / jnp.sqrt(float(fan_in))
        w = jax.random.uniform(kw, (fan_in, fan_out), jnp.float32, -bound, bound)
        b = jax.random.uniform(kb, (1, fan_out), jnp.float32, -bound, bound)
        params.append((w, b))
    return params


def reference_forward(x, params):
    """JAX reference that mirrors the kernel's bf16-input / f32-accumulate math."""
    h = x
    n = len(params)
    for i, (w, b) in enumerate(params):
        h = jnp.dot(h.astype(jnp.bfloat16), w.astype(jnp.bfloat16),
                    preferred_element_type=jnp.float32) + b
        if i < n - 1:
            h = jnp.maximum(h, 0.0)
    return h


if __name__ == "__main__":
    key = jax.random.PRNGKey(0)
    key, kx = jax.random.split(key)
    params = init_params(key)

    # Small-batch test: whole batch handled in a single grid step.
    B = 16
    x = jax.random.normal(kx, (B, D_IN), dtype=jnp.float32)
    out = jax.block_until_ready(net_forward(x, params))
    ref = reference_forward(x, params)
    assert out.shape == (B, D_OUT)
    assert jnp.allclose(out, ref, atol=2e-3, rtol=2e-3), "mismatch vs. JAX reference"

    # Ragged / multi-step test: exercises batch padding and grid > 1.
    B2 = 40
    key, kx2 = jax.random.split(key)
    x2 = jax.random.normal(kx2, (B2, D_IN), dtype=jnp.float32)
    out2 = jax.block_until_ready(net_forward(x2, params, tb=16))
    ref2 = reference_forward(x2, params)
    assert out2.shape == (B2, D_OUT)
    assert jnp.allclose(out2, ref2, atol=2e-3, rtol=2e-3), "mismatch vs. JAX reference"

    print("KERNEL_OK")
</pallas_src>

<mosaic_0001>
module attributes {stable_mosaic.version = 11 : i64} {
  func.func @mlp_kernel(%arg0: i32, %arg1: memref<16x93xbf16, #tpu.memory_space<vmem>>, %arg2: memref<93x50xbf16, #tpu.memory_space<vmem>>, %arg3: memref<1x50xf32, #tpu.memory_space<vmem>>, %arg4: memref<50x25xbf16, #tpu.memory_space<vmem>>, %arg5: memref<1x25xf32, #tpu.memory_space<vmem>>, %arg6: memref<25x12xbf16, #tpu.memory_space<vmem>>, %arg7: memref<1x12xf32, #tpu.memory_space<vmem>>, %arg8: memref<12x128xbf16, #tpu.memory_space<vmem>>, %arg9: memref<1x128xf32, #tpu.memory_space<vmem>>, %arg10: memref<16x128xf32, #tpu.memory_space<vmem>>) attributes {dimension_semantics = [#tpu.dimension_semantics<parallel>], iteration_bounds = array<i64: 1>, scalar_prefetch = 0 : i64, scratch_operands = 0 : i64, tpu.core_type = #tpu.core_type<tc>, window_params = [{transform_indices = @transform_0, window_bounds = array<i64: 16, 93>}, {pipeline_mode = #tpu.pipeline_mode<synchronous>, transform_indices = @transform_1, window_bounds = array<i64: 93, 50>}, {pipeline_mode = #tpu.pipeline_mode<synchronous>, transform_indices = @transform_2, window_bounds = array<i64: 1, 50>}, {pipeline_mode = #tpu.pipeline_mode<synchronous>, transform_indices = @transform_3, window_bounds = array<i64: 50, 25>}, {pipeline_mode = #tpu.pipeline_mode<synchronous>, transform_indices = @transform_4, window_bounds = array<i64: 1, 25>}, {pipeline_mode = #tpu.pipeline_mode<synchronous>, transform_indices = @transform_5, window_bounds = array<i64: 25, 12>}, {pipeline_mode = #tpu.pipeline_mode<synchronous>, transform_indices = @transform_6, window_bounds = array<i64: 1, 12>}, {pipeline_mode = #tpu.pipeline_mode<synchronous>, transform_indices = @transform_7, window_bounds = array<i64: 12, 128>}, {pipeline_mode = #tpu.pipeline_mode<synchronous>, transform_indices = @transform_8, window_bounds = array<i64: 1, 128>}, {transform_indices = @transform_9, window_bounds = array<i64: 16, 128>}]} {
    %c0 = arith.constant 0 : index
    %c0_0 = arith.constant 0 : index
    %0 = vector.load %arg1[%c0, %c0_0] : memref<16x93xbf16, #tpu.memory_space<vmem>>, vector<16x93xbf16>
    %c0_1 = arith.constant 0 : index
    %c0_2 = arith.constant 0 : index
    %1 = vector.load %arg2[%c0_1, %c0_2] : memref<93x50xbf16, #tpu.memory_space<vmem>>, vector<93x50xbf16>
    %cst = arith.constant dense<0.000000e+00> : vector<16x50xf32>
    %2 = tpu.matmul %0, %1, %cst {dimension_numbers = #tpu.dot_dimension_numbers<[1], [0], [0], [1], [0, 0, 1, 1], [], []>} : vector<16x93xbf16>, vector<93x50xbf16>, vector<16x50xf32> -> vector<16x50xf32>
    %c0_3 = arith.constant 0 : index
    %c0_4 = arith.constant 0 : index
    %3 = vector.load %arg3[%c0_3, %c0_4] : memref<1x50xf32, #tpu.memory_space<vmem>>, vector<1x50xf32>
    %4 = vector.broadcast %3 : vector<1x50xf32> to vector<16x50xf32>
    %5 = arith.addf %2, %4 : vector<16x50xf32>
    %cst_5 = arith.constant 0.000000e+00 : f32
    %6 = vector.broadcast %cst_5 : f32 to vector<16x50xf32>
    %7 = arith.maximumf %5, %6 : vector<16x50xf32>
    %8 = arith.truncf %7 : vector<16x50xf32> to vector<16x50xbf16>
    %c0_6 = arith.constant 0 : index
    %c0_7 = arith.constant 0 : index
    %9 = vector.load %arg4[%c0_6, %c0_7] : memref<50x25xbf16, #tpu.memory_space<vmem>>, vector<50x25xbf16>
    %cst_8 = arith.constant dense<0.000000e+00> : vector<16x25xf32>
    %10 = tpu.matmul %8, %9, %cst_8 {dimension_numbers = #tpu.dot_dimension_numbers<[1], [0], [0], [1], [0, 0, 1, 1], [], []>} : vector<16x50xbf16>, vector<50x25xbf16>, vector<16x25xf32> -> vector<16x25xf32>
    %c0_9 = arith.constant 0 : index
    %c0_10 = arith.constant 0 : index
    %11 = vector.load %arg5[%c0_9, %c0_10] : memref<1x25xf32, #tpu.memory_space<vmem>>, vector<1x25xf32>
    %12 = vector.broadcast %11 : vector<1x25xf32> to vector<16x25xf32>
    %13 = arith.addf %10, %12 : vector<16x25xf32>
    %cst_11 = arith.constant 0.000000e+00 : f32
    %14 = vector.broadcast %cst_11 : f32 to vector<16x25xf32>
    %15 = arith.maximumf %13, %14 : vector<16x25xf32>
    %16 = arith.truncf %15 : vector<16x25xf32> to vector<16x25xbf16>
    %c0_12 = arith.constant 0 : index
    %c0_13 = arith.constant 0 : index
    %17 = vector.load %arg6[%c0_12, %c0_13] : memref<25x12xbf16, #tpu.memory_space<vmem>>, vector<25x12xbf16>
    %cst_14 = arith.constant dense<0.000000e+00> : vector<16x12xf32>
    %18 = tpu.matmul %16, %17, %cst_14 {dimension_numbers = #tpu.dot_dimension_numbers<[1], [0], [0], [1], [0, 0, 1, 1], [], []>} : vector<16x25xbf16>, vector<25x12xbf16>, vector<16x12xf32> -> vector<16x12xf32>
    %c0_15 = arith.constant 0 : index
    %c0_16 = arith.constant 0 : index
    %19 = vector.load %arg7[%c0_15, %c0_16] : memref<1x12xf32, #tpu.memory_space<vmem>>, vector<1x12xf32>
    %20 = vector.broadcast %19 : vector<1x12xf32> to vector<16x12xf32>
    %21 = arith.addf %18, %20 : vector<16x12xf32>
    %cst_17 = arith.constant 0.000000e+00 : f32
    %22 = vector.broadcast %cst_17 : f32 to vector<16x12xf32>
    %23 = arith.maximumf %21, %22 : vector<16x12xf32>
    %24 = arith.truncf %23 : vector<16x12xf32> to vector<16x12xbf16>
    %c0_18 = arith.constant 0 : index
    %c0_19 = arith.constant 0 : index
    %25 = vector.load %arg8[%c0_18, %c0_19] : memref<12x128xbf16, #tpu.memory_space<vmem>>, vector<12x128xbf16>
    %cst_20 = arith.constant dense<0.000000e+00> : vector<16x128xf32>
    %26 = tpu.matmul %24, %25, %cst_20 {dimension_numbers = #tpu.dot_dimension_numbers<[1], [0], [0], [1], [0, 0, 1, 1], [], []>} : vector<16x12xbf16>, vector<12x128xbf16>, vector<16x128xf32> -> vector<16x128xf32>
    %c0_21 = arith.constant 0 : index
    %c0_22 = arith.constant 0 : index
    %27 = vector.load %arg9[%c0_21, %c0_22] : memref<1x128xf32, #tpu.memory_space<vmem>>, vector<1x128xf32>
    %28 = vector.broadcast %27 : vector<1x128xf32> to vector<16x128xf32>
    %29 = arith.addf %26, %28 : vector<16x128xf32>
    %c0_23 = arith.constant 0 : index
    %c0_24 = arith.constant 0 : index
    %30 = vector.load %arg10[%c0_23, %c0_24] : memref<16x128xf32, #tpu.memory_space<vmem>>, vector<16x128xf32>
    tpu.vector_store %arg10[%c0_23, %c0_24], %29 {strides = array<i32>} : memref<16x128xf32, #tpu.memory_space<vmem>>, vector<16x128xf32>,
    return
  }
  func.func @transform_0(%arg0: i32) -> (i32, i32) {
    %c0_i32 = arith.constant 0 : i32
    %c0_i32_0 = arith.constant 0 : i32
    return %arg0, %c0_i32 : i32, i32
  }
  func.func @transform_1(%arg0: i32) -> (i32, i32) {
    %c0_i32 = arith.constant 0 : i32
    %c0_i32_0 = arith.constant 0 : i32
    %c0_i32_1 = arith.constant 0 : i32
    return %c0_i32, %c0_i32_0 : i32, i32
  }
  func.func @transform_2(%arg0: i32) -> (i32, i32) {
    %c0_i32 = arith.constant 0 : i32
    %c0_i32_0 = arith.constant 0 : i32
    %c0_i32_1 = arith.constant 0 : i32
    return %c0_i32, %c0_i32_0 : i32, i32
  }
  func.func @transform_3(%arg0: i32) -> (i32, i32) {
    %c0_i32 = arith.constant 0 : i32
    %c0_i32_0 = arith.constant 0 : i32
    %c0_i32_1 = arith.constant 0 : i32
    return %c0_i32, %c0_i32_0 : i32, i32
  }
  func.func @transform_4(%arg0: i32) -> (i32, i32) {
    %c0_i32 = arith.constant 0 : i32
    %c0_i32_0 = arith.constant 0 : i32
    %c0_i32_1 = arith.constant 0 : i32
    return %c0_i32, %c0_i32_0 : i32, i32
  }
  func.func @transform_5(%arg0: i32) -> (i32, i32) {
    %c0_i32 = arith.constant 0 : i32
    %c0_i32_0 = arith.constant 0 : i32
    %c0_i32_1 = arith.constant 0 : i32
    return %c0_i32, %c0_i32_0 : i32, i32
  }
  func.func @transform_6(%arg0: i32) -> (i32, i32) {
    %c0_i32 = arith.constant 0 : i32
    %c0_i32_0 = arith.constant 0 : i32
    %c0_i32_1 = arith.constant 0 : i32
    return %c0_i32, %c0_i32_0 : i32, i32
  }
  func.func @transform_7(%arg0: i32) -> (i32, i32) {
    %c0_i32 = arith.constant 0 : i32
    %c0_i32_0 = arith.constant 0 : i32
    %c0_i32_1 = arith.constant 0 : i32
    return %c0_i32, %c0_i32_0 : i32, i32
  }
  func.func @transform_8(%arg0: i32) -> (i32, i32) {
    %c0_i32 = arith.constant 0 : i32
    %c0_i32_0 = arith.constant 0 : i32
    %c0_i32_1 = arith.constant 0 : i32
    return %c0_i32, %c0_i32_0 : i32, i32
  }
  func.func @transform_9(%arg0: i32) -> (i32, i32) {
    %c0_i32 = arith.constant 0 : i32
    %c0_i32_0 = arith.constant 0 : i32
    return %arg0, %c0_i32 : i32, i32
  }
}

</mosaic_0001>

<llo_original>
// kernel: tpu_custom_call.1
$region0: #{tpu_custom_call.1}
  #allocation0 [shape = 'u32[]', space=smem, size = 0x4, offset = 0x4, fixed_abs, tag = 'smem constant byte address 0x4 - core index']
  #allocation1 [shape = 'u32[144,128]{1,0:T(1,128)}', space=vmem, size = 0x12000, scoped, tag = 'internal scratch']
  %s0 = inlined_call_operand.vmem [shape: bf16[16,93], index: 0, kind: input, shape index: {}]
  %s1 = inlined_call_operand.vmem [shape: bf16[93,50], index: 1, kind: input, shape index: {}]
  %s2 = inlined_call_operand.vmem [shape: f32[1,50], index: 2, kind: input, shape index: {}]
  %s3 = inlined_call_operand.vmem [shape: bf16[50,25], index: 3, kind: input, shape index: {}]
  %s4 = inlined_call_operand.vmem [shape: f32[1,25], index: 4, kind: input, shape index: {}]
  %s5 = inlined_call_operand.vmem [shape: bf16[25,12], index: 5, kind: input, shape index: {}]
  %s6 = inlined_call_operand.vmem [shape: f32[1,12], index: 6, kind: input, shape index: {}]
  %s7 = inlined_call_operand.vmem [shape: bf16[12,128], index: 7, kind: input, shape index: {}]
  %s8 = inlined_call_operand.vmem [shape: f32[1,128], index: 8, kind: input, shape index: {}]
  %s9 = inlined_call_operand.hbm [shape: f32[16,128], index: 9, kind: output, shape index: {}]
  %s10 = sld [smem:[#allocation0]]
  $region46: #{tpu_custom_call.1} parent=0
    _
  %s12 = ssub.s32 1, %s10
  %s13 = scalar_select 0, %s12, %s10
  $region1: #{tpu_custom_call.1} parent=0
    #allocation2 [shape = 'u8[8192]{0}', space=vmem, size = 0x2000, scoped, tag = 'output window, operand 0, single buffered']
    #allocation3 [shape = 's32[1]{0}', space=sflag, size = 0x4, scoped, tag = 'scoped memory for tpu_custom_call.1']
    %14 = vsyncpa [#allocation3], 0
    // Predicated region
    $region2: #{tpu_custom_call.1} parent=1 // pred_check
      _
    $region3: #{tpu_custom_call.1} parent=1 // pred_check_branch
      %16 = sbr.rel (0) target = $region5
    $region4: #{tpu_custom_call.1} parent=1 // pred_region
      _
    $region5: #{tpu_custom_call.1} parent=1 // pred_fallthru
      _
    // Predicated region
    $region6: #{tpu_custom_call.1} parent=1 // pred_check
      _
    $region7: #{tpu_custom_call.1} parent=1 // pred_check_branch
      %18 = sbr.rel (0) target = $region9
    $region8: #{tpu_custom_call.1} parent=1 // pred_region
      _
    $region9: #{tpu_custom_call.1} parent=1 // pred_fallthru
      _
    // Predicated region
    $region10: #{tpu_custom_call.1} parent=1 // pred_check
      _
    $region11: #{tpu_custom_call.1} parent=1 // pred_check_branch
      %20 = sbr.rel (0) target = $region13
    $region12: #{tpu_custom_call.1} parent=1 // pred_region
      _
    $region13: #{tpu_custom_call.1} parent=1 // pred_fallthru
      _
    // Predicated region
    $region14: #{tpu_custom_call.1} parent=1 // pred_check
      _
    $region15: #{tpu_custom_call.1} parent=1 // pred_check_branch
      %22 = sbr.rel (0) target = $region17
    $region16: #{tpu_custom_call.1} parent=1 // pred_region
      _
    $region17: #{tpu_custom_call.1} parent=1 // pred_fallthru
      _
    // Predicated region
    $region18: #{tpu_custom_call.1} parent=1 // pred_check
      _
    $region19: #{tpu_custom_call.1} parent=1 // pred_check_branch
      %24 = sbr.rel (0) target = $region21
    $region20: #{tpu_custom_call.1} parent=1 // pred_region
      _
    $region21: #{tpu_custom_call.1} parent=1 // pred_fallthru
      _
    // Predicated region
    $region22: #{tpu_custom_call.1} parent=1 // pred_check
      _
    $region23: #{tpu_custom_call.1} parent=1 // pred_check_branch
      %26 = sbr.rel (0) target = $region25
    $region24: #{tpu_custom_call.1} parent=1 // pred_region
      _
    $region25: #{tpu_custom_call.1} parent=1 // pred_fallthru
      _
    // Predicated region
    $region26: #{tpu_custom_call.1} parent=1 // pred_check
      _
    $region27: #{tpu_custom_call.1} parent=1 // pred_check_branch
      %28 = sbr.rel (0) target = $region29
    $region28: #{tpu_custom_call.1} parent=1 // pred_region
      _
    $region29: #{tpu_custom_call.1} parent=1 // pred_fallthru
      _
    // Predicated region
    $region30: #{tpu_custom_call.1} parent=1 // pred_check
      _
    $region31: #{tpu_custom_call.1} parent=1 // pred_check_branch
      %30 = sbr.rel (0) target = $region33
    $region32: #{tpu_custom_call.1} parent=1 // pred_region
      _
    $region33: #{tpu_custom_call.1} parent=1 // pred_fallthru
      _
    // Predicated region
    $region34: #{tpu_custom_call.1} parent=1 // pred_check
      _
    $region35: #{tpu_custom_call.1} parent=1 // pred_check_branch
      %32 = sbr.rel (0) target = $region37
    $region36: #{tpu_custom_call.1} parent=1 // pred_region
      _
    $region37: #{tpu_custom_call.1} parent=1 // pred_fallthru
      _
    %v34 = vld [vmem:[%s0] sm:$0xf]
    %v35 = vld [vmem:[%s0 + $0x4] sm:$0xf]
    %v36 = vld [vmem:[%s1] sm:$0xf]
    %v37 = vld [vmem:[%s1 + $0x4] sm:$0xf]
    %v38 = vld [vmem:[%s1 + $0x8] sm:$0xf]
    %v39 = vld [vmem:[%s1 + $0xc] sm:$0xf]
    %v40 = vld [vmem:[%s1 + $0x10] sm:$0xf]
    %v41 = vld [vmem:[%s1 + $0x14] sm:$0xf]
    %v42 = vld [vmem:[%s1 + $0x18] sm:$0xf]
    %v43 = vld [vmem:[%s1 + $0x1c] sm:$0xf]
    %v44 = vld [vmem:[%s1 + $0x20] sm:$0xf]
    %v45 = vld [vmem:[%s1 + $0x24] sm:$0xf]
    %v46 = vld [vmem:[%s1 + $0x28] sm:$0xf]
    %v47 = vld [vmem:[%s1 + $0x2c] sm:$0x7]
    %v48 = vld [vmem:[%s2] sm:$0x1]
    %v50 = vlaneseq
    %v51 = vshrl.u32 %v50, 7
    %v52 = vsub.s32 0, %v51
    %v53 = vrot.slane %v48, %v52
    %v57 = vunpack.c.l.b16 %v34
    %v58 = vunpack.c.l.b16 %v35
    %v59 = vpack.c.b16 %v58, %v57
    %v72 = vunpack.c.l.b16 %v36
    %v73 = vunpack.c.l.b16 %v37
    %v74 = vunpack.c.l.b16 %v38
    %v75 = vunpack.c.l.b16 %v39
    %v76 = vunpack.c.l.b16 %v40
    %v77 = vunpack.c.l.b16 %v41
    %v78 = vunpack.c.l.b16 %v42
    %v79 = vunpack.c.l.b16 %v43
    %v80 = vunpack.c.l.b16 %v44
    %v81 = vunpack.c.l.b16 %v45
    %v82 = vunpack.c.l.b16 %v46
    %v83 = vunpack.c.l.b16 %v47
    %v84 = vpack.c.b16 %v73, %v72
    %v85 = vpack.c.b16 %v75, %v74
    %v86 = vpack.c.b16 %v77, %v76
    %v87 = vpack.c.b16 %v79, %v78
    %v88 = vpack.c.b16 %v81, %v80
    %v89 = vpack.c.b16 %v83, %v82
    %vm95 = vcmask 760832
    %v97 = vsel %vm95, %v59, 0
    %vm99 = vcmask 1045504
    %vm100 = vcmask 1046528
    %v101 = vsel %vm99, 4294967295, 65535
    %v102 = vsel %vm100, %v101, 0
    %v104 = vand.u32 %v89, %v102
    %106 = vmatprep.subr.bf16.mxu0 0
    %107 = vmatpush1.bf16.msra.mxu0 %v84
    %108 = vmatprep.subr.bf16.mxu0 0
    %109 = vmatpush1.bf16.msra.mxu0 %v85
    %110 = vmatprep.subr.bf16.mxu0 0
    %111 = vmatpush1.bf16.msra.mxu0 %v86
    %112 = vmatprep.subr.bf16.mxu0 0
    %113 = vmatpush1.bf16.msra.mxu0 %v87
    %114 = vmatprep.subr.bf16.mxu0 0
    %115 = vmatpush1.bf16.msra.mxu0 %v88
    %116 = vmatprep.subr.bf16.mxu0 0
    %117 = vmatpush1.bf16.msra.mxu0 %v104
    %118 = vmatprep.subr.bf16.mxu0 0
    %119 = vmatpush1.bf16.msra.mxu0 0
    %120 = vmatprep.subr.bf16.mxu0 0
    %121 = vmatpush1.bf16.msra.mxu0 0
    %122 = vmatprep.subr.bf16.mxu0 0
    %123 = vmatpush1.bf16.msra.mxu0 0
    %124 = vmatprep.subr.bf16.mxu0 0
    %125 = vmatpush1.bf16.msra.mxu0 0
    %126 = vmatprep.subr.bf16.mxu0 0
    %127 = vmatpush1.bf16.msra.mxu0 0
    %128 = vmatprep.subr.bf16.mxu0 0
    %129 = vmatpush1.bf16.msra.mxu0 0
    %130 = vmatprep.subr.bf16.mxu0 0
    %131 = vmatpush1.bf16.msra.mxu0 0
    %132 = vmatprep.subr.bf16.mxu0 0
    %133 = vmatpush1.bf16.msra.mxu0 0
    %134 = vmatprep.subr.bf16.mxu0 0
    %135 = vmatpush1.bf16.msra.mxu0 0
    %136 = vmatprep.subr.bf16.mxu0 0
    %137 = vmatpush1.bf16.msra.mxu0 0
    %138 = vmatprep.mubr.bf16.mxu0 0
    %139 = vmatmul.mubr.bf16.gmra.mrb[0].mxu0 %v97
    %v140 = vpop.f32.mrb[0].mxu0
    %v141 = vadd.f32 %v53, %v140
    %v142 = vpop.f32.mrb[0].mxu0
    %v143 = vpop.f32.mrb[0].mxu0
    %v144 = vadd.f32 %v53, %v143
    %v145 = vpop.f32.mrb[0].mxu0
    %146 = vdwg.mxu0
    %v147 = vmax.f32 %v141, 0.0
    %v148 = vmax.f32 %v144, 0.0
    %v149 = vpack.c.bf16 %v148, %v147
    %v150 = vld [vmem:[%s3] sm:$0xf]
    %v151 = vld [vmem:[%s3 + $0x4] sm:$0xf]
    %v152 = vld [vmem:[%s3 + $0x8] sm:$0xf]
    %v153 = vld [vmem:[%s3 + $0xc] sm:$0xf]
    %v154 = vld [vmem:[%s3 + $0x10] sm:$0xf]
    %v155 = vld [vmem:[%s3 + $0x14] sm:$0xf]
    %v156 = vld [vmem:[%s3 + $0x18] sm:$0x1]
    %v157 = vld [vmem:[%s4] sm:$0x1]
    %v159 = vlaneseq
    %v160 = vshrl.u32 %v159, 7
    %v161 = vsub.s32 0, %v160
    %v162 = vrot.slane %v157, %v161
    %v171 = vunpack.c.l.b16 %v150
    %v172 = vunpack.c.l.b16 %v151
    %v173 = vunpack.c.l.b16 %v152
    %v174 = vunpack.c.l.b16 %v153
    %v175 = vunpack.c.l.b16 %v154
    %v176 = vunpack.c.l.b16 %v155
    %v177 = vunpack.c.l.b16 %v156
    %v178 = vpack.c.b16 %v172, %v171
    %v179 = vpack.c.b16 %v174, %v173
    %v180 = vpack.c.b16 %v176, %v175
    %v181 = vpack.c.b16 %v177, %v177
    %vm185 = vcmask 408576
    %v187 = vsel %vm185, %v149, 0
    %vm189 = vcmask 1040384
    %v191 = vsel %vm189, %v181, 0
    %193 = vmatprep.subr.bf16.mxu0 0
    %194 = vmatpush1.bf16.msra.mxu0 %v178
    %195 = vmatprep.subr.bf16.mxu0 0
    %196 = vmatpush1.bf16.msra.mxu0 %v179
    %197 = vmatprep.subr.bf16.mxu0 0
    %198 = vmatpush1.bf16.msra.mxu0 %v180
    %199 = vmatprep.subr.bf16.mxu0 0
    %200 = vmatpush1.bf16.msra.mxu0 %v191
    %201 = vmatprep.subr.bf16.mxu0 0
    %202 = vmatpush1.bf16.msra.mxu0 0
    %203 = vmatprep.subr.bf16.mxu0 0
    %204 = vmatpush1.bf16.msra.mxu0 0
    %205 = vmatprep.subr.bf16.mxu0 0
    %206 = vmatpush1.bf16.msra.mxu0 0
    %207 = vmatprep.subr.bf16.mxu0 0
    %208 = vmatpush1.bf16.msra.mxu0 0
    %209 = vmatprep.subr.bf16.mxu0 0
    %210 = vmatpush1.bf16.msra.mxu0 0
    %211 = vmatprep.subr.bf16.mxu0 0
    %212 = vmatpush1.bf16.msra.mxu0 0
    %213 = vmatprep.subr.bf16.mxu0 0
    %214 = vmatpush1.bf16.msra.mxu0 0
    %215 = vmatprep.subr.bf16.mxu0 0
    %216 = vmatpush1.bf16.msra.mxu0 0
    %217 = vmatprep.subr.bf16.mxu0 0
    %218 = vmatpush1.bf16.msra.mxu0 0
    %219 = vmatprep.subr.bf16.mxu0 0
    %220 = vmatpush1.bf16.msra.mxu0 0
    %221 = vmatprep.subr.bf16.mxu0 0
    %222 = vmatpush1.bf16.msra.mxu0 0
    %223 = vmatprep.subr.bf16.mxu0 0
    %224 = vmatpush1.bf16.msra.mxu0 0
    %225 = vmatprep.mubr.bf16.mxu0 0
    %226 = vmatmul.mubr.bf16.gmra.mrb[0].mxu0 %v187
    %v227 = vpop.f32.mrb[0].mxu0
    %v228 = vadd.f32 %v162, %v227
    %v229 = vpop.f32.mrb[0].mxu0
    %v230 = vpop.f32.mrb[0].mxu0
    %v231 = vadd.f32 %v162, %v230
    %v232 = vpop.f32.mrb[0].mxu0
    %233 = vdwg.mxu0
    %v234 = vmax.f32 %v228, 0.0
    %v235 = vmax.f32 %v231, 0.0
    %v236 = vpack.c.bf16 %v235, %v234
    %v237 = vld [vmem:[%s5] sm:$0xf]
    %v238 = vld [vmem:[%s5 + $0x4] sm:$0xf]
    %v239 = vld [vmem:[%s5 + $0x8] sm:$0xf]
    %v240 = vld [vmem:[%s5 + $0xc] sm:$0x1]
    %v241 = vld [vmem:[%s6] sm:$0x1]
    %v243 = vlaneseq
    %v244 = vshrl.u32 %v243, 7
    %v245 = vsub.s32 0, %v244
    %v246 = vrot.slane %v241, %v245
    %v252 = vunpack.c.l.b16 %v237
    %v253 = vunpack.c.l.b16 %v238
    %v254 = vunpack.c.l.b16 %v239
    %v255 = vunpack.c.l.b16 %v240
    %v256 = vpack.c.b16 %v253, %v252
    %v257 = vpack.c.b16 %v255, %v254
    %vm259 = vcmask 203776
    %v261 = vsel %vm259, %v236, 0
    %vm263 = vcmask 1043456
    %vm264 = vcmask 1044480
    %v265 = vsel %vm263, 4294967295, 65535
    %v266 = vsel %vm264, %v265, 0
    %v268 = vand.u32 %v257, %v266
    %270 = vmatprep.subr.bf16.mxu0 0
    %271 = vmatpush1.bf16.msra.mxu0 %v256
    %272 = vmatprep.subr.bf16.mxu0 0
    %273 = vmatpush1.bf16.msra.mxu0 %v268
    %274 = vmatprep.subr.bf16.mxu0 0
    %275 = vmatpush1.bf16.msra.mxu0 0
    %276 = vmatprep.subr.bf16.mxu0 0
    %277 = vmatpush1.bf16.msra.mxu0 0
    %278 = vmatprep.subr.bf16.mxu0 0
    %279 = vmatpush1.bf16.msra.mxu0 0
    %280 = vmatprep.subr.bf16.mxu0 0
    %281 = vmatpush1.bf16.msra.mxu0 0
    %282 = vmatprep.subr.bf16.mxu0 0
    %283 = vmatpush1.bf16.msra.mxu0 0
    %284 = vmatprep.subr.bf16.mxu0 0
    %285 = vmatpush1.bf16.msra.mxu0 0
    %286 = vmatprep.subr.bf16.mxu0 0
    %287 = vmatpush1.bf16.msra.mxu0 0
    %288 = vmatprep.subr.bf16.mxu0 0
    %289 = vmatpush1.bf16.msra.mxu0 0
    %290 = vmatprep.subr.bf16.mxu0 0
    %291 = vmatpush1.bf16.msra.mxu0 0
    %292 = vmatprep.subr.bf16.mxu0 0
    %293 = vmatpush1.bf16.msra.mxu0 0
    %294 = vmatprep.subr.bf16.mxu0 0
    %295 = vmatpush1.bf16.msra.mxu0 0
    %296 = vmatprep.subr.bf16.mxu0 0
    %297 = vmatpush1.bf16.msra.mxu0 0
    %298 = vmatprep.subr.bf16.mxu0 0
    %299 = vmatpush1.bf16.msra.mxu0 0
    %300 = vmatprep.subr.bf16.mxu0 0
    %301 = vmatpush1.bf16.msra.mxu0 0
    %302 = vmatprep.mubr.bf16.mxu0 0
    %303 = vmatmul.mubr.bf16.gmra.mrb[0].mxu0 %v261
    %v304 = vpop.f32.mrb[0].mxu0
    %v305 = vadd.f32 %v246, %v304
    %v306 = vpop.f32.mrb[0].mxu0
    %v307 = vpop.f32.mrb[0].mxu0
    %v308 = vadd.f32 %v246, %v307
    %v309 = vpop.f32.mrb[0].mxu0
    %310 = vdwg.mxu0
    %v311 = vmax.f32 %v305, 0.0
    %v312 = vmax.f32 %v308, 0.0
    %v313 = vpack.c.bf16 %v312, %v311
    %v314 = vld [vmem:[%s7] sm:$0xf]
    %v315 = vld [vmem:[%s7 + $0x4] sm:$0x3]
    %v316 = vld [vmem:[%s8] sm:$0x1]
    %v318 = vlaneseq
    %v319 = vshrl.u32 %v318, 7
    %v320 = vsub.s32 0, %v319
    %v321 = vrot.slane %v316, %v320
    %v325 = vunpack.c.l.b16 %v314
    %v326 = vunpack.c.l.b16 %v315
    %v327 = vpack.c.b16 %v326, %v325
    %vm328 = vcmask 97280
    %v330 = vsel %vm328, %v313, 0
    %v333 = vsel %vm99, %v327, 0
    %335 = vmatprep.subr.bf16.mxu0 0
    %336 = vmatpush1.bf16.msra.mxu0 %v333
    %337 = vmatprep.subr.bf16.mxu0 0
    %338 = vmatpush1.bf16.msra.mxu0 0
    %339 = vmatprep.subr.bf16.mxu0 0
    %340 = vmatpush1.bf16.msra.mxu0 0
    %341 = vmatprep.subr.bf16.mxu0 0
    %342 = vmatpush1.bf16.msra.mxu0 0
    %343 = vmatprep.subr.bf16.mxu0 0
    %344 = vmatpush1.bf16.msra.mxu0 0
    %345 = vmatprep.subr.bf16.mxu0 0
    %346 = vmatpush1.bf16.msra.mxu0 0
    %347 = vmatprep.subr.bf16.mxu0 0
    %348 = vmatpush1.bf16.msra.mxu0 0
    %349 = vmatprep.subr.bf16.mxu0 0
    %350 = vmatpush1.bf16.msra.mxu0 0
    %351 = vmatprep.subr.bf16.mxu0 0
    %352 = vmatpush1.bf16.msra.mxu0 0
    %353 = vmatprep.subr.bf16.mxu0 0
    %354 = vmatpush1.bf16.msra.mxu0 0
    %355 = vmatprep.subr.bf16.mxu0 0
    %356 = vmatpush1.bf16.msra.mxu0 0
    %357 = vmatprep.subr.bf16.mxu0 0
    %358 = vmatpush1.bf16.msra.mxu0 0
    %359 = vmatprep.subr.bf16.mxu0 0
    %360 = vmatpush1.bf16.msra.mxu0 0
    %361 = vmatprep.subr.bf16.mxu0 0
    %362 = vmatpush1.bf16.msra.mxu0 0
    %363 = vmatprep.subr.bf16.mxu0 0
    %364 = vmatpush1.bf16.msra.mxu0 0
    %365 = vmatprep.subr.bf16.mxu0 0
    %366 = vmatpush1.bf16.msra.mxu0 0
    %367 = vmatprep.mubr.bf16.mxu0 0
    %368 = vmatmul.mubr.bf16.gmra.mrb[0].mxu0 %v330
    %v369 = vpop.f32.mrb[0].mxu0
    %v370 = vadd.f32 %v321, %v369
    %v371 = vpop.f32.mrb[0].mxu0
    %v372 = vpop.f32.mrb[0].mxu0
    %v373 = vadd.f32 %v321, %v372
    %v374 = vpop.f32.mrb[0].mxu0
    %375 = vdwg.mxu0
    %376 = vst [vmem:[#allocation2] sm:$0xff] %v370
    %377 = vst [vmem:[#allocation2 + $0x8] sm:$0xff] %v373
    // Predicated region
    $region38: #{tpu_custom_call.1} parent=1 // pred_check
      _
    $region39: #{tpu_custom_call.1} parent=1 // pred_check_branch
      %379 = sbr.rel (0) target = $region41
    $region40: #{tpu_custom_call.1} parent=1 // pred_region
      %s381 = ssub.s32 256, 256
      %382 = vsyncadd [#allocation3], %s381
      %s383 = sshll.u32 [#allocation2], 4
      %s384 = int_to_ptr.vmem [resolvable:$true] %s383
      %389 = dma.vmem_to_hbm [thread:$0]  %s384, 256, %s9, [#allocation3], 128, 128, 8
    $region41: #{tpu_custom_call.1} parent=1 // pred_fallthru
      _
    // Predicated region
    $region42: #{tpu_custom_call.1} parent=1 // pred_check
      _
    $region43: #{tpu_custom_call.1} parent=1 // pred_check_branch
      %391 = sbr.rel (0) target = $region45
    $region44: #{tpu_custom_call.1} parent=1 // pred_region
      %392 = dma.done [#allocation3], 256
    $region45: #{tpu_custom_call.1} parent=1 // pred_fallthru
      _
    %393 = vsyncpa [#allocation3], 1

</llo_original>
